<compile_context>
chip_gen: v7x
topology: tpu7x:2x2x1
jax: 0.10.0
libtpu: 0.0.40
codegen_flags: <defaults>
</compile_context>

<pallas_src>
import functools

import jax
import jax.numpy as jnp
from jax.experimental import pallas as pl
from jax.experimental.pallas import tpu as pltpu

HIDDEN = 200   # nn.Linear(input_features, 200) and nn.Linear(200, 200)
LANE = 128


def hidden_layer_kernel(x_ref, w1_ref, w2_ref, vec_ref, o_ref, *, inv_n1, inv_n2):
    """vec_ref rows: 0 = b1, 1 = colsum(W1), 2 = b2, 3 = colsum(W2); all (1, Hp)."""
    b1 = vec_ref[0:1, :]
    cs1 = vec_ref[1:2, :]
    b2 = vec_ref[2:3, :]
    cs2 = vec_ref[3:4, :]

    # ---- layer 1: relu((x - mean(x)) @ W1 + b1), mean folded into the bias ----
    x = x_ref[...]                                  # (B, F) f32
    m1 = jnp.sum(x) * inv_n1                        # scalar mean over true elems (XLU, overlaps MXU)
    h = jnp.dot(x, w1_ref[...], preferred_element_type=jnp.float32)
    h = h + (b1 - m1 * cs1)                         # (x-m1)@W1+b1 == x@W1 + (b1 - m1*colsum(W1))
    h = jnp.maximum(h, 0.0)                         # padded cols stay exactly 0

    # ---- layer 2: relu((h - mean(h)) @ W2 + b2), mean folded into the bias ----
    # Padded columns of h are exactly 0 => sum over padded block == sum over
    # the true 200 columns; divide by the TRUE count (B*200).
    m2 = jnp.sum(h) * inv_n2
    o = jnp.dot(h, w2_ref[...], preferred_element_type=jnp.float32)
    o = o + (b2 - m2 * cs2)
    o_ref[...] = jnp.maximum(o, 0.0)                # lane-dense (B, 256) unmasked store


def prepare_hidden_layer_params(w1, b1, w2, b2):
    """One-time weight prep (call at weight-load time, NOT per forward).

    w1: (F, 200), b1: (1, 200), w2: (200, 200), b2: (1, 200)
    (weights already transposed to (in_features, out_features)).
    Returns (w1p, w2p, vec) with the hidden dim zero-padded to 256 and the
    four (1, Hp) vectors (b1, colsum(W1), b2, colsum(W2)) stacked into (4, Hp).
    """
    F, H = w1.shape
    Hp = ((H + LANE - 1) // LANE) * LANE            # 200 -> 256
    f32 = jnp.float32

    w1p = jnp.zeros((F, Hp), f32).at[:, :H].set(w1.astype(f32))
    w2p = jnp.zeros((Hp, Hp), f32).at[:H, :H].set(w2.astype(f32))
    b1p = jnp.zeros((1, Hp), f32).at[:, :H].set(b1.reshape(1, H).astype(f32))
    b2p = jnp.zeros((1, Hp), f32).at[:, :H].set(b2.reshape(1, H).astype(f32))

    cs1 = jnp.sum(w1p, axis=0, keepdims=True)       # (1, Hp); padded cols -> 0
    cs2 = jnp.sum(w2p, axis=0, keepdims=True)       # (1, Hp)

    vec = jnp.concatenate([b1p, cs1, b2p, cs2], axis=0)   # (4, Hp), one operand
    return w1p, w2p, vec


def hidden_layer(x, w1p, w2p, vec):
    """x: (B, F) f32; prepared params from prepare_hidden_layer_params().

    Returns (B, 200) f32, matching the PyTorch forward.
    """
    B, F = x.shape
    Hp = w1p.shape[1]
    H = HIDDEN

    kernel = functools.partial(
        hidden_layer_kernel,
        inv_n1=1.0 / float(B * F),                  # mean over all of x
        inv_n2=1.0 / float(B * H),                  # mean over the TRUE 200-wide h
    )

    vmem = pl.BlockSpec(memory_space=pltpu.MemorySpace.VMEM)

    # Ungridded call: whole operands land in VMEM once, no double-buffering.
    out_padded = pl.pallas_call(
        kernel,
        out_shape=jax.ShapeDtypeStruct((B, Hp), jnp.float32),
        in_specs=[vmem, vmem, vmem, vmem],          # x, W1, W2, stacked vectors
        out_specs=vmem,
    )(x, w1p, w2p, vec)

    # Slice the lane-padding off outside the kernel (API returns 200 features).
    return out_padded[:, :H]


def reference(x, w1, b1, w2, b2):
    x = x - jnp.mean(x)
    h = jnp.maximum(x @ w1 + b1, 0.0)
    h = h - jnp.mean(h)
    return jnp.maximum(h @ w2 + b2, 0.0)


if __name__ == "__main__":
    key = jax.random.PRNGKey(0)
    batch, input_features = 8, 32

    kx, kw1, kb1, kw2, kb2 = jax.random.split(key, 5)

    x = jax.random.normal(kx, (batch, input_features), dtype=jnp.float32)

    # PyTorch Linear init ranges; weights stored transposed as (in, out).
    bound1 = 1.0 / jnp.sqrt(input_features)
    w1 = jax.random.uniform(kw1, (input_features, HIDDEN), jnp.float32, -bound1, bound1)
    b1 = jax.random.uniform(kb1, (1, HIDDEN), jnp.float32, -bound1, bound1)

    bound2 = 1.0 / jnp.sqrt(HIDDEN)
    w2 = jax.random.uniform(kw2, (HIDDEN, HIDDEN), jnp.float32, -bound2, bound2)
    b2 = jax.random.uniform(kb2, (1, HIDDEN), jnp.float32, -bound2, bound2)

    # One-time weight prep (out of the per-call hot path).
    w1p, w2p, vec = prepare_hidden_layer_params(w1, b1, w2, b2)
    w1p, w2p, vec = jax.block_until_ready((w1p, w2p, vec))

    out = hidden_layer(x, w1p, w2p, vec)
    out = jax.block_until_ready(out)

    ref = reference(x, w1, b1, w2, b2)
    assert out.shape == (batch, HIDDEN)
    assert jnp.allclose(out, ref, atol=1e-4, rtol=1e-4), "mismatch vs reference"

    print("KERNEL_OK")
</pallas_src>

<mosaic_0001>
module attributes {stable_mosaic.version = 11 : i64} {
  func.func @hidden_layer_kernel(%arg0: memref<8x32xf32, #tpu.memory_space<vmem>>, %arg1: memref<32x256xf32, #tpu.memory_space<vmem>>, %arg2: memref<256x256xf32, #tpu.memory_space<vmem>>, %arg3: memref<4x256xf32, #tpu.memory_space<vmem>>, %arg4: memref<8x256xf32, #tpu.memory_space<vmem>>) attributes {dimension_semantics = [], scalar_prefetch = 0 : i64, scratch_operands = 0 : i64, tpu.core_type = #tpu.core_type<tc>} {
    %c0 = arith.constant 0 : index
    %c0_0 = arith.constant 0 : index
    %0 = vector.load %arg3[%c0, %c0_0] : memref<4x256xf32, #tpu.memory_space<vmem>>, vector<1x256xf32>
    %c1 = arith.constant 1 : index
    %c0_1 = arith.constant 0 : index
    %1 = vector.load %arg3[%c1, %c0_1] : memref<4x256xf32, #tpu.memory_space<vmem>>, vector<1x256xf32>
    %c2 = arith.constant 2 : index
    %c0_2 = arith.constant 0 : index
    %2 = vector.load %arg3[%c2, %c0_2] : memref<4x256xf32, #tpu.memory_space<vmem>>, vector<1x256xf32>
    %c3 = arith.constant 3 : index
    %c0_3 = arith.constant 0 : index
    %3 = vector.load %arg3[%c3, %c0_3] : memref<4x256xf32, #tpu.memory_space<vmem>>, vector<1x256xf32>
    %c0_4 = arith.constant 0 : index
    %c0_5 = arith.constant 0 : index
    %4 = vector.load %arg0[%c0_4, %c0_5] : memref<8x32xf32, #tpu.memory_space<vmem>>, vector<8x32xf32>
    %5 = vector.shape_cast %4 : vector<8x32xf32> to vector<1x8x32xf32>
    %cst = arith.constant dense<0.000000e+00> : vector<1xf32>
    %6 = vector.multi_reduction <add>, %5, %cst [1, 2] : vector<1x8x32xf32> to vector<1xf32>
    %7 = vector.shape_cast %6 : vector<1xf32> to vector<1x1x1xf32>
    %8 = vector.extract %7[0, 0, 0] : f32 from vector<1x1x1xf32>
    %cst_6 = arith.constant 3.906250e-03 : f32
    %9 = arith.mulf %8, %cst_6 : f32
    %c0_7 = arith.constant 0 : index
    %c0_8 = arith.constant 0 : index
    %10 = vector.load %arg1[%c0_7, %c0_8] : memref<32x256xf32, #tpu.memory_space<vmem>>, vector<32x256xf32>
    %cst_9 = arith.constant dense<0.000000e+00> : vector<8x256xf32>
    %11 = tpu.matmul %4, %10, %cst_9 {dimension_numbers = #tpu.dot_dimension_numbers<[1], [0], [0], [1], [0, 0, 1, 1], [], []>} : vector<8x32xf32>, vector<32x256xf32>, vector<8x256xf32> -> vector<8x256xf32>
    %12 = vector.broadcast %9 : f32 to vector<1x256xf32>
    %13 = arith.mulf %12, %1 : vector<1x256xf32>
    %14 = arith.subf %0, %13 : vector<1x256xf32>
    %15 = vector.broadcast %14 : vector<1x256xf32> to vector<8x256xf32>
    %16 = arith.addf %11, %15 : vector<8x256xf32>
    %cst_10 = arith.constant 0.000000e+00 : f32
    %17 = vector.broadcast %cst_10 : f32 to vector<8x256xf32>
    %18 = arith.maximumf %16, %17 : vector<8x256xf32>
    %19 = vector.shape_cast %18 : vector<8x256xf32> to vector<1x8x256xf32>
    %cst_11 = arith.constant dense<0.000000e+00> : vector<1xf32>
    %20 = vector.multi_reduction <add>, %19, %cst_11 [1, 2] : vector<1x8x256xf32> to vector<1xf32>
    %21 = vector.shape_cast %20 : vector<1xf32> to vector<1x1x1xf32>
    %22 = vector.extract %21[0, 0, 0] : f32 from vector<1x1x1xf32>
    %cst_12 = arith.constant 6.250000e-04 : f32
    %23 = arith.mulf %22, %cst_12 : f32
    %c0_13 = arith.constant 0 : index
    %c0_14 = arith.constant 0 : index
    %24 = vector.load %arg2[%c0_13, %c0_14] : memref<256x256xf32, #tpu.memory_space<vmem>>, vector<256x256xf32>
    %cst_15 = arith.constant dense<0.000000e+00> : vector<8x256xf32>
    %25 = tpu.matmul %18, %24, %cst_15 {dimension_numbers = #tpu.dot_dimension_numbers<[1], [0], [0], [1], [0, 0, 1, 1], [], []>} : vector<8x256xf32>, vector<256x256xf32>, vector<8x256xf32> -> vector<8x256xf32>
    %26 = vector.broadcast %23 : f32 to vector<1x256xf32>
    %27 = arith.mulf %26, %3 : vector<1x256xf32>
    %28 = arith.subf %2, %27 : vector<1x256xf32>
    %29 = vector.broadcast %28 : vector<1x256xf32> to vector<8x256xf32>
    %30 = arith.addf %25, %29 : vector<8x256xf32>
    %cst_16 = arith.constant 0.000000e+00 : f32
    %31 = vector.broadcast %cst_16 : f32 to vector<8x256xf32>
    %32 = arith.maximumf %30, %31 : vector<8x256xf32>
    %c0_17 = arith.constant 0 : index
    %c0_18 = arith.constant 0 : index
    %33 = vector.load %arg4[%c0_17, %c0_18] : memref<8x256xf32, #tpu.memory_space<vmem>>, vector<8x256xf32>
    tpu.vector_store %arg4[%c0_17, %c0_18], %32 {strides = array<i32>} : memref<8x256xf32, #tpu.memory_space<vmem>>, vector<8x256xf32>,
    return
  }
}

</mosaic_0001>

<llo_original>
// kernel: tpu_custom_call.1
$region0: #{tpu_custom_call.1}
  #allocation0 [shape = 'u32[]', space=smem, size = 0x4, offset = 0x4, fixed_abs, tag = 'smem constant byte address 0x4 - core index']
  #allocation1 [shape = 'u32[144,128]{1,0:T(1,128)}', space=vmem, size = 0x12000, scoped, tag = 'internal scratch']
  %s0 = inlined_call_operand.hbm [shape: f32[8,32], index: 0, kind: input, shape index: {}]
  %s1 = inlined_call_operand.hbm [shape: f32[32,256], index: 1, kind: input, shape index: {}]
  %s2 = inlined_call_operand.hbm [shape: f32[256,256], index: 2, kind: input, shape index: {}]
  %s3 = inlined_call_operand.vmem [shape: f32[4,256], index: 3, kind: input, shape index: {}]
  %s4 = inlined_call_operand.hbm [shape: f32[8,256], index: 4, kind: output, shape index: {}]
  %s5 = sld [smem:[#allocation0]]
  $region38: #{tpu_custom_call.1} parent=0
    _
  %s7 = ssub.s32 1, %s5
  %s8 = scalar_select 0, %s7, %s5
  $region1: #{tpu_custom_call.1} parent=0
    #allocation2 [shape = 'u8[4096]{0}', space=vmem, size = 0x1000, scoped, tag = 'input window, operand 0, single buffered']
    #allocation3 [shape = 's32[1]{0}', space=sflag, size = 0x4, scoped, tag = 'scoped memory for tpu_custom_call.1']
    #allocation4 [shape = 's32[1]{0}', space=sflag, size = 0x4, scoped, tag = 'scoped memory for tpu_custom_call.1']
    #allocation5 [shape = 'u8[32768]{0}', space=vmem, size = 0x8000, scoped, tag = 'input window, operand 1, single buffered']
    #allocation6 [shape = 's32[1]{0}', space=sflag, size = 0x4, scoped, tag = 'scoped memory for tpu_custom_call.1']
    #allocation7 [shape = 'u8[262144]{0}', space=vmem, size = 0x40000, scoped, tag = 'input window, operand 2, single buffered']
    #allocation8 [shape = 'u8[8192]{0}', space=vmem, size = 0x2000, scoped, tag = 'output window, operand 0, single buffered']
    %9 = vsyncpa [#allocation3], 0
    %10 = vsyncpa [#allocation6], 0
    %11 = vsyncpa [#allocation4], 0
    // Predicated region
    $region2: #{tpu_custom_call.1} parent=1 // pred_check
      _
    $region3: #{tpu_custom_call.1} parent=1 // pred_check_branch
      %13 = sbr.rel (0) target = $region5
    $region4: #{tpu_custom_call.1} parent=1 // pred_region
      %s15 = ssub.s32 128, 128
      %16 = vsyncadd [#allocation3], %s15
      %s18 = sshll.u32 [#allocation2], 4
      %s19 = int_to_ptr.vmem [resolvable:$true] %s18
      %21 = dma.hbm_to_vmem [thread:$0]  %s0, 128, %s19, [#allocation3]
    $region5: #{tpu_custom_call.1} parent=1 // pred_fallthru
      _
    // Predicated region
    $region6: #{tpu_custom_call.1} parent=1 // pred_check
      _
    $region7: #{tpu_custom_call.1} parent=1 // pred_check_branch
      %23 = sbr.rel (0) target = $region9
    $region8: #{tpu_custom_call.1} parent=1 // pred_region
      %s25 = ssub.s32 1024, 1024
      %26 = vsyncadd [#allocation6], %s25
      %s27 = sshll.u32 [#allocation5], 4
      %s28 = int_to_ptr.vmem [resolvable:$true] %s27
      %33 = dma.hbm_to_vmem [thread:$0]  %s1, 1024, %s28, [#allocation6], 256, 256, 16
    $region9: #{tpu_custom_call.1} parent=1 // pred_fallthru
      _
    // Predicated region
    $region10: #{tpu_custom_call.1} parent=1 // pred_check
      _
    $region11: #{tpu_custom_call.1} parent=1 // pred_check_branch
      %35 = sbr.rel (0) target = $region13
    $region12: #{tpu_custom_call.1} parent=1 // pred_region
      %s37 = ssub.s32 8192, 8192
      %38 = vsyncadd [#allocation6], %s37
      %s39 = sshll.u32 [#allocation7], 4
      %s40 = int_to_ptr.vmem [resolvable:$true] %s39
      %45 = dma.hbm_to_vmem [thread:$0]  %s2, 8192, %s40, [#allocation6], 256, 256, 16
    $region13: #{tpu_custom_call.1} parent=1 // pred_fallthru
      _
    // Predicated region
    $region14: #{tpu_custom_call.1} parent=1 // pred_check
      _
    $region15: #{tpu_custom_call.1} parent=1 // pred_check_branch
      %47 = sbr.rel (0) target = $region17
    $region16: #{tpu_custom_call.1} parent=1 // pred_region
      _
    $region17: #{tpu_custom_call.1} parent=1 // pred_fallthru
      _
    // Predicated region
    $region18: #{tpu_custom_call.1} parent=1 // pred_check
      _
    $region19: #{tpu_custom_call.1} parent=1 // pred_check_branch
      %49 = sbr.rel (0) target = $region21
    $region20: #{tpu_custom_call.1} parent=1 // pred_region
      %50 = dma.done [#allocation3], 128
    $region21: #{tpu_custom_call.1} parent=1 // pred_fallthru
      _
    // Predicated region
    $region22: #{tpu_custom_call.1} parent=1 // pred_check
      _
    $region23: #{tpu_custom_call.1} parent=1 // pred_check_branch
      %52 = sbr.rel (0) target = $region25
    $region24: #{tpu_custom_call.1} parent=1 // pred_region
      %53 = dma.done [#allocation6], 1024
    $region25: #{tpu_custom_call.1} parent=1 // pred_fallthru
      _
    // Predicated region
    $region26: #{tpu_custom_call.1} parent=1 // pred_check
      _
    $region27: #{tpu_custom_call.1} parent=1 // pred_check_branch
      %55 = sbr.rel (0) target = $region29
    $region28: #{tpu_custom_call.1} parent=1 // pred_region
      %56 = dma.done [#allocation6], 8192
    $region29: #{tpu_custom_call.1} parent=1 // pred_fallthru
      _
    %v57 = vld [vmem:[%s3] ss:$4 sm:$0x3]
    %s58 = scalar_lea.vmem %s3, 1
    %v59 = vld [vmem:[%s58] ss:$4 sm:$0x3]
    %s60 = scalar_lea.vmem %s3, 2
    %v61 = vld [vmem:[%s60] ss:$4 sm:$0x3]
    %s62 = scalar_lea.vmem %s3, 3
    %v63 = vld [vmem:[%s62] ss:$4 sm:$0x3]
    %v64 = vld [vmem:[#allocation2] sm:$0xff]
    %vm65 = vcmask 261120
    %v66 = vsel %vm65, %v64, 0.0
    %67 = vadd.xlane.f32.xlu0 %v66
    %v68 = vpop.xlane.xlu0 %67
    %v69 = vrot.slane %v68, 4
    %v70 = vadd.f32 %v68, %v69
    %v71 = vrot.slane %v70, 2
    %v72 = vadd.f32 %v70, %v71
    %v73 = vrot.slane %v72, 1
    %v74 = vadd.f32 %v72, %v73
    %s75 = vtos %v74
    %s76 = smul.f32 %s75, 0.00390625
    %v77 = vld [vmem:[#allocation5] sm:$0xff]
    %v78 = vld [vmem:[#allocation5 + $0x8] sm:$0xff]
    %v79 = vld [vmem:[#allocation5 + $0x10] sm:$0xff]
    %v80 = vld [vmem:[#allocation5 + $0x18] sm:$0xff]
    %v81 = vld [vmem:[#allocation5 + $0x20] sm:$0xff]
    %v82 = vld [vmem:[#allocation5 + $0x28] sm:$0xff]
    %v83 = vld [vmem:[#allocation5 + $0x30] sm:$0xff]
    %v84 = vld [vmem:[#allocation5 + $0x38] sm:$0xff]
    %v85 = vstv %s76
    %v86 = vmul.f32 %v85, %v59
    %v87 = vsub.f32 %v57, %v86
    %v89 = vlaneseq
    %v90 = vshrl.u32 %v89, 7
    %v91 = vsub.s32 0, %v90
    %v92 = vrot.slane %v87, %v91
    %v93 = vlaneseq
    %v94 = vshrl.u32 %v93, 7
    %v95 = vsub.s32 1, %v94
    %v96 = vrot.slane %v87, %v95
    %v100 = vsel %vm65, %v64, 0
    %102 = vmatprep.subr.mxu0 %v78
    %103 = vmatpush1.msra.mxu0 %v77
    %104 = vmatprep.subr.mxu0 %v80
    %105 = vmatpush1.msra.mxu0 %v79
    %106 = vmatprep.subr.mxu0 %v82
    %107 = vmatpush1.msra.mxu0 %v81
    %108 = vmatprep.subr.mxu0 %v84
    %109 = vmatpush1.msra.mxu0 %v83
    %110 = vmatprep.subr.mxu0 0.0
    %111 = vmatpush1.msra.mxu0 0.0
    %112 = vmatprep.subr.mxu0 0.0
    %113 = vmatpush1.msra.mxu0 0.0
    %114 = vmatprep.subr.mxu0 0.0
    %115 = vmatpush1.msra.mxu0 0.0
    %116 = vmatprep.subr.mxu0 0.0
    %117 = vmatpush1.msra.mxu0 0.0
    %118 = vmatprep.subr.mxu0 0.0
    %119 = vmatpush1.msra.mxu0 0.0
    %120 = vmatprep.subr.mxu0 0.0
    %121 = vmatpush1.msra.mxu0 0.0
    %122 = vmatprep.subr.mxu0 0.0
    %123 = vmatpush1.msra.mxu0 0.0
    %124 = vmatprep.subr.mxu0 0.0
    %125 = vmatpush1.msra.mxu0 0.0
    %126 = vmatprep.subr.mxu0 0.0
    %127 = vmatpush1.msra.mxu0 0.0
    %128 = vmatprep.subr.mxu0 0.0
    %129 = vmatpush1.msra.mxu0 0.0
    %130 = vmatprep.subr.mxu0 0.0
    %131 = vmatpush1.msra.mxu0 0.0
    %132 = vmatprep.subr.mxu0 0.0
    %133 = vmatpush1.msra.mxu0 0.0
    %134 = vmatprep.subr.mxu0 0.0
    %135 = vmatpush1.msra.mxu0 0.0
    %136 = vmatprep.subr.mxu0 0.0
    %137 = vmatpush1.msra.mxu0 0.0
    %138 = vmatprep.subr.mxu0 0.0
    %139 = vmatpush1.msra.mxu0 0.0
    %140 = vmatprep.subr.mxu0 0.0
    %141 = vmatpush1.msra.mxu0 0.0
    %142 = vmatprep.subr.mxu0 0.0
    %143 = vmatpush1.msra.mxu0 0.0
    %144 = vmatprep.subr.mxu0 0.0
    %145 = vmatpush1.msra.mxu0 0.0
    %146 = vmatprep.subr.mxu0 0.0
    %147 = vmatpush1.msra.mxu0 0.0
    %148 = vmatprep.subr.mxu0 0.0
    %149 = vmatpush1.msra.mxu0 0.0
    %150 = vmatprep.subr.mxu0 0.0
    %151 = vmatpush1.msra.mxu0 0.0
    %152 = vmatprep.subr.mxu0 0.0
    %153 = vmatpush1.msra.mxu0 0.0
    %154 = vmatprep.subr.mxu0 0.0
    %155 = vmatpush1.msra.mxu0 0.0
    %156 = vmatprep.subr.mxu0 0.0
    %157 = vmatpush1.msra.mxu0 0.0
    %158 = vmatprep.subr.mxu0 0.0
    %159 = vmatpush1.msra.mxu0 0.0
    %160 = vmatprep.subr.mxu0 0.0
    %161 = vmatpush1.msra.mxu0 0.0
    %162 = vmatprep.subr.mxu0 0.0
    %163 = vmatpush1.msra.mxu0 0.0
    %164 = vmatprep.subr.mxu0 0.0
    %165 = vmatpush1.msra.mxu0 0.0
    %166 = vmatprep.mubr.f32.mxu0 0.0
    %167 = vmatmul.mubr.f32.gmra.mrb[0].mxu0 %v100
    %v168 = vpop.f32.mrb[0].mxu0
    %v169 = vadd.f32 %v92, %v168
    %v170 = vpop.f32.mrb[0].mxu0
    %v171 = vadd.f32 %v96, %v170
    %172 = vdwg.mxu0
    %v173 = vmax.f32 %v169, 0.0
    %v174 = vmax.f32 %v171, 0.0
    %v175 = vadd.f32 %v173, %v174
    %176 = vadd.xlane.f32.xlu0 %v175
    %v177 = vpop.xlane.xlu0 %176
    %v178 = vrot.slane %v177, 4
    %v179 = vadd.f32 %v177, %v178
    %v180 = vrot.slane %v179, 2
    %v181 = vadd.f32 %v179, %v180
    %v182 = vrot.slane %v181, 1
    %v183 = vadd.f32 %v181, %v182
    %s184 = vtos %v183
    %s185 = smul.f32 %s184, 0.000625
    %v186 = vld [vmem:[#allocation7] sm:$0xff]
    %v187 = vld [vmem:[#allocation7 + $0x8] sm:$0xff]
    %v188 = vld [vmem:[#allocation7 + $0x10] sm:$0xff]
    %v189 = vld [vmem:[#allocation7 + $0x18] sm:$0xff]
    %v190 = vld [vmem:[#allocation7 + $0x20] sm:$0xff]
    %v191 = vld [vmem:[#allocation7 + $0x28] sm:$0xff]
    %v192 = vld [vmem:[#allocation7 + $0x30] sm:$0xff]
    %v193 = vld [vmem:[#allocation7 + $0x38] sm:$0xff]
    %v194 = vld [vmem:[#allocation7 + $0x40] sm:$0xff]
    %v195 = vld [vmem:[#allocation7 + $0x48] sm:$0xff]
    %v196 = vld [vmem:[#allocation7 + $0x50] sm:$0xff]
    %v197 = vld [vmem:[#allocation7 + $0x58] sm:$0xff]
    %v198 = vld [vmem:[#allocation7 + $0x60] sm:$0xff]
    %v199 = vld [vmem:[#allocation7 + $0x68] sm:$0xff]
    %v200 = vld [vmem:[#allocation7 + $0x70] sm:$0xff]
    %v201 = vld [vmem:[#allocation7 + $0x78] sm:$0xff]
    %v202 = vld [vmem:[#allocation7 + $0x80] sm:$0xff]
    %v203 = vld [vmem:[#allocation7 + $0x88] sm:$0xff]
    %v204 = vld [vmem:[#allocation7 + $0x90] sm:$0xff]
    %v205 = vld [vmem:[#allocation7 + $0x98] sm:$0xff]
    %v206 = vld [vmem:[#allocation7 + $0xa0] sm:$0xff]
    %v207 = vld [vmem:[#allocation7 + $0xa8] sm:$0xff]
    %v208 = vld [vmem:[#allocation7 + $0xb0] sm:$0xff]
    %v209 = vld [vmem:[#allocation7 + $0xb8] sm:$0xff]
    %v210 = vld [vmem:[#allocation7 + $0xc0] sm:$0xff]
    %v211 = vld [vmem:[#allocation7 + $0xc8] sm:$0xff]
    %v212 = vld [vmem:[#allocation7 + $0xd0] sm:$0xff]
    %v213 = vld [vmem:[#allocation7 + $0xd8] sm:$0xff]
    %v214 = vld [vmem:[#allocation7 + $0xe0] sm:$0xff]
    %v215 = vld [vmem:[#allocation7 + $0xe8] sm:$0xff]
    %v216 = vld [vmem:[#allocation7 + $0xf0] sm:$0xff]
    %v217 = vld [vmem:[#allocation7 + $0xf8] sm:$0xff]
    %v218 = vld [vmem:[#allocation7 + $0x100] sm:$0xff]
    %v219 = vld [vmem:[#allocation7 + $0x108] sm:$0xff]
    %v220 = vld [vmem:[#allocation7 + $0x110] sm:$0xff]
    %v221 = vld [vmem:[#allocation7 + $0x118] sm:$0xff]
    %v222 = vld [vmem:[#allocation7 + $0x120] sm:$0xff]
    %v223 = vld [vmem:[#allocation7 + $0x128] sm:$0xff]
    %v224 = vld [vmem:[#allocation7 + $0x130] sm:$0xff]
    %v225 = vld [vmem:[#allocation7 + $0x138] sm:$0xff]
    %v226 = vld [vmem:[#allocation7 + $0x140] sm:$0xff]
    %v227 = vld [vmem:[#allocation7 + $0x148] sm:$0xff]
    %v228 = vld [vmem:[#allocation7 + $0x150] sm:$0xff]
    %v229 = vld [vmem:[#allocation7 + $0x158] sm:$0xff]
    %v230 = vld [vmem:[#allocation7 + $0x160] sm:$0xff]
    %v231 = vld [vmem:[#allocation7 + $0x168] sm:$0xff]
    %v232 = vld [vmem:[#allocation7 + $0x170] sm:$0xff]
    %v233 = vld [vmem:[#allocation7 + $0x178] sm:$0xff]
    %v234 = vld [vmem:[#allocation7 + $0x180] sm:$0xff]
    %v235 = vld [vmem:[#allocation7 + $0x188] sm:$0xff]
    %v236 = vld [vmem:[#allocation7 + $0x190] sm:$0xff]
    %v237 = vld [vmem:[#allocation7 + $0x198] sm:$0xff]
    %v238 = vld [vmem:[#allocation7 + $0x1a0] sm:$0xff]
    %v239 = vld [vmem:[#allocation7 + $0x1a8] sm:$0xff]
    %v240 = vld [vmem:[#allocation7 + $0x1b0] sm:$0xff]
    %v241 = vld [vmem:[#allocation7 + $0x1b8] sm:$0xff]
    %v242 = vld [vmem:[#allocation7 + $0x1c0] sm:$0xff]
    %v243 = vld [vmem:[#allocation7 + $0x1c8] sm:$0xff]
    %v244 = vld [vmem:[#allocation7 + $0x1d0] sm:$0xff]
    %v245 = vld [vmem:[#allocation7 + $0x1d8] sm:$0xff]
    %v246 = vld [vmem:[#allocation7 + $0x1e0] sm:$0xff]
    %v247 = vld [vmem:[#allocation7 + $0x1e8] sm:$0xff]
    %v248 = vld [vmem:[#allocation7 + $0x1f0] sm:$0xff]
    %v249 = vld [vmem:[#allocation7 + $0x1f8] sm:$0xff]
    %v250 = vstv %s185
    %v251 = vmul.f32 %v250, %v63
    %v252 = vsub.f32 %v61, %v251
    %v254 = vlaneseq
    %v255 = vshrl.u32 %v254, 7
    %v256 = vsub.s32 0, %v255
    %v257 = vrot.slane %v252, %v256
    %v258 = vlaneseq
    %v259 = vshrl.u32 %v258, 7
    %v260 = vsub.s32 1, %v259
    %v261 = vrot.slane %v252, %v260
    %264 = vmatprep.subr.mxu0 %v187
    %265 = vmatpush1.msra.mxu0 %v186
    %266 = vmatprep.subr.mxu0 %v189
    %267 = vmatpush1.msra.mxu0 %v188
    %268 = vmatprep.subr.mxu0 %v191
    %269 = vmatpush1.msra.mxu0 %v190
    %270 = vmatprep.subr.mxu0 %v193
    %271 = vmatpush1.msra.mxu0 %v192
    %272 = vmatprep.subr.mxu0 %v195
    %273 = vmatpush1.msra.mxu0 %v194
    %274 = vmatprep.subr.mxu0 %v197
    %275 = vmatpush1.msra.mxu0 %v196
    %276 = vmatprep.subr.mxu0 %v199
    %277 = vmatpush1.msra.mxu0 %v198
    %278 = vmatprep.subr.mxu0 %v201
    %279 = vmatpush1.msra.mxu0 %v200
    %280 = vmatprep.subr.mxu0 %v203
    %281 = vmatpush1.msra.mxu0 %v202
    %282 = vmatprep.subr.mxu0 %v205
    %283 = vmatpush1.msra.mxu0 %v204
    %284 = vmatprep.subr.mxu0 %v207
    %285 = vmatpush1.msra.mxu0 %v206
    %286 = vmatprep.subr.mxu0 %v209
    %287 = vmatpush1.msra.mxu0 %v208
    %288 = vmatprep.subr.mxu0 %v211
    %289 = vmatpush1.msra.mxu0 %v210
    %290 = vmatprep.subr.mxu0 %v213
    %291 = vmatpush1.msra.mxu0 %v212
    %292 = vmatprep.subr.mxu0 %v215
    %293 = vmatpush1.msra.mxu0 %v214
    %294 = vmatprep.subr.mxu0 %v217
    %295 = vmatpush1.msra.mxu0 %v216
    %296 = vmatprep.subr.mxu0 %v219
    %297 = vmatpush1.msra.mxu0 %v218
    %298 = vmatprep.subr.mxu0 %v221
    %299 = vmatpush1.msra.mxu0 %v220
    %300 = vmatprep.subr.mxu0 %v223
    %301 = vmatpush1.msra.mxu0 %v222
    %302 = vmatprep.subr.mxu0 %v225
    %303 = vmatpush1.msra.mxu0 %v224
    %304 = vmatprep.subr.mxu0 %v227
    %305 = vmatpush1.msra.mxu0 %v226
    %306 = vmatprep.subr.mxu0 %v229
    %307 = vmatpush1.msra.mxu0 %v228
    %308 = vmatprep.subr.mxu0 %v231
    %309 = vmatpush1.msra.mxu0 %v230
    %310 = vmatprep.subr.mxu0 %v233
    %311 = vmatpush1.msra.mxu0 %v232
    %312 = vmatprep.subr.mxu0 %v235
    %313 = vmatpush1.msra.mxu0 %v234
    %314 = vmatprep.subr.mxu0 %v237
    %315 = vmatpush1.msra.mxu0 %v236
    %316 = vmatprep.subr.mxu0 %v239
    %317 = vmatpush1.msra.mxu0 %v238
    %318 = vmatprep.subr.mxu0 %v241
    %319 = vmatpush1.msra.mxu0 %v240
    %320 = vmatprep.subr.mxu0 %v243
    %321 = vmatpush1.msra.mxu0 %v242
    %322 = vmatprep.subr.mxu0 %v245
    %323 = vmatpush1.msra.mxu0 %v244
    %324 = vmatprep.subr.mxu0 %v247
    %325 = vmatpush1.msra.mxu0 %v246
    %326 = vmatprep.subr.mxu0 %v249
    %327 = vmatpush1.msra.mxu0 %v248
    %328 = vmatprep.mubr.f32.mxu0 %v174
    %329 = vmatmul.mubr.f32.gmra.mrb[0].mxu0 %v173
    %v330 = vpop.f32.mrb[0].mxu0
    %v331 = vadd.f32 %v257, %v330
    %v332 = vpop.f32.mrb[0].mxu0
    %v333 = vadd.f32 %v261, %v332
    %334 = vdwg.mxu0
    %v335 = vmax.f32 %v331, 0.0
    %v336 = vmax.f32 %v333, 0.0
    %337 = vst [vmem:[#allocation8] sm:$0xff] %v335
    %338 = vst [vmem:[#allocation8 + $0x8] sm:$0xff] %v336
    // Predicated region
    $region30: #{tpu_custom_call.1} parent=1 // pred_check
      _
    $region31: #{tpu_custom_call.1} parent=1 // pred_check_branch
      %340 = sbr.rel (0) target = $region33
    $region32: #{tpu_custom_call.1} parent=1 // pred_region
      %s342 = ssub.s32 256, 256
      %343 = vsyncadd [#allocation4], %s342
      %s345 = sshll.u32 [#allocation8], 4
      %s346 = int_to_ptr.vmem [resolvable:$true] %s345
      %348 = dma.vmem_to_hbm [thread:$0]  %s346, 256, %s4, [#allocation4]
    $region33: #{tpu_custom_call.1} parent=1 // pred_fallthru
      _
    // Predicated region
    $region34: #{tpu_custom_call.1} parent=1 // pred_check
      _
    $region35: #{tpu_custom_call.1} parent=1 // pred_check_branch
      %350 = sbr.rel (0) target = $region37
    $region36: #{tpu_custom_call.1} parent=1 // pred_region
      %351 = dma.done [#allocation4], 256
    $region37: #{tpu_custom_call.1} parent=1 // pred_fallthru
      _
    %352 = vsyncpa [#allocation3], 1
    %353 = vsyncpa [#allocation6], 1
    %354 = vsyncpa [#allocation4], 1

</llo_original>
